<compile_context>
chip_gen: v5e
topology: v5e:2x2
jax: 0.10.0
libtpu: 0.0.40
codegen_flags: <defaults>
</compile_context>

<pallas_src>
import functools

import jax
import jax.numpy as jnp
from jax import lax
from jax.experimental import pallas as pl
from jax.experimental.pallas import tpu as pltpu

BN_EPS = 1e-5
COMPUTE_DTYPE = jnp.bfloat16      # MXU-native inputs; accumulation / BN math in f32.
TM_CAP = 2048                     # upper bound on lane-tile width (v5e/v6e benefit)
VMEM_BUDGET = 24 * 1024 * 1024    # conservative double-buffer budget (v7x-safe)


def _round_up(x, m):
    return (x + m - 1) // m * m


def _pick_tile(m, kp, co_p):
    """Pick TM: largest multiple of 128 within the VMEM budget that minimizes M padding."""
    # Double-buffered bytes per M-column across both calls (patch in + bf16 y out,
    # then bf16 y in + f32 out); conservative so tiles fit v7x's smaller VMEM.
    per_col = 2 * (kp * 2) + 2 * (co_p * 2) + 2 * (co_p * 2) + 2 * (co_p * 4)
    cap = max(128, min(TM_CAP, (VMEM_BUDGET // per_col) // 128 * 128))
    best = None  # (waste, tm); iterate large->small so ties keep the largest tile.
    for tm in range(cap, 0, -128):
        waste = _round_up(m, tm) - m
        if best is None or waste < best[0]:
            best = (waste, tm)
    tm = best[1]
    return tm, _round_up(m, tm)


def conv_stats_kernel(w_ref, p_ref, y_ref, part_ref):
    """Phase 1: conv matmul per M-tile; store y (bf16) + per-tile BN partial sums.

    w_ref:    (CO, Kp)      bf16 weights (Cout padded to mult. of 8, K padded)
    p_ref:    (Kp, TM)      bf16 im2col patch tile (M on the lane axis)
    y_ref:    (CO, TM)      bf16 conv output tile (lane-dense, unmasked stores)
    part_ref: (2*CO, 128)   f32 per-tile partials: rows [0:CO]=sum, [CO:2CO]=sumsq
    """
    co = w_ref.shape[0]
    y = jnp.dot(w_ref[...], p_ref[...], preferred_element_type=jnp.float32)  # (CO, TM) f32
    y_ref[...] = y.astype(y_ref.dtype)
    # Per-channel partial sum / sum-of-squares for this tile (XLU cross-lane reduce;
    # MXU/VPU have slack).  Broadcast across all 128 lanes of the partials block so
    # the store is an unmasked full-lane vst; the host-side reduce reads lane 0.
    s = jnp.sum(y, axis=1, keepdims=True)
    ss = jnp.sum(y * y, axis=1, keepdims=True)
    part_ref[0:co, :] = jnp.broadcast_to(s, (co, part_ref.shape[1]))
    part_ref[co:, :] = jnp.broadcast_to(ss, (co, part_ref.shape[1]))


def bn_relu6_kernel(scale_ref, shift_ref, y_ref, o_ref):
    """Phase 2: elementwise y*scale + shift, ReLU6, lane-dense f32 store.

    scale_ref/shift_ref: (CO, 1) f32 pre-folded BN affine;  y_ref: (CO, TM) bf16.
    """
    y = y_ref[...].astype(jnp.float32)
    o_ref[...] = jnp.clip(y * scale_ref[...] + shift_ref[...], 0.0, 6.0)


@functools.partial(jax.jit, static_argnames=("kernel", "stride", "pad"))
def simple_convolution_forward(x_nchw, conv_w, bn_gamma, bn_beta,
                               kernel=3, stride=2, pad=1):
    """x_nchw: (N, Cin, H, W); conv_w: (Cout, Cin, Kh, Kw). Returns NCHW f32 output."""
    n, cin, h, w = x_nchw.shape
    cout = conv_w.shape[0]
    ho = (h + 2 * pad - kernel) // stride + 1
    wo = (w + 2 * pad - kernel) // stride + 1
    m = n * ho * wo
    kdim = kernel * kernel * cin

    # Feature-major im2col built directly in (K, M) layout, in bf16 (halves the
    # host-side HBM traffic of the gather vs f32):
    # patches_t[(kh*Kw + kw)*Cin + c, (n*Ho + oh)*Wo + ow] = xpad[n, c, s*oh+kh, s*ow+kw]
    xp = jnp.pad(x_nchw.astype(COMPUTE_DTYPE),
                 ((0, 0), (0, 0), (pad, pad), (pad, pad)))
    slabs = []
    for i in range(kernel):
        for j in range(kernel):
            s = xp[:, :, i:i + ho * stride:stride, j:j + wo * stride:stride]  # (N,Cin,Ho,Wo)
            slabs.append(jnp.transpose(s, (1, 0, 2, 3)).reshape(cin, m))
    patches_t = jnp.concatenate(slabs, axis=0)                                # (K, M)

    # Pad to clean TPU tiles: K -> bf16 sublane-packing multiple, Cout -> mult of 8,
    # M -> multiple of 128 only (waste < 128 cols); padded cols are exact zeros so
    # they contribute nothing to the BN sums.
    k_align = 16 if COMPUTE_DTYPE == jnp.bfloat16 else 8
    kp = _round_up(kdim, k_align)
    co_p = _round_up(cout, 8)
    tm, mp = _pick_tile(m, kp, co_p)
    num_tiles = mp // tm

    patches_t = jnp.pad(patches_t, ((0, kp - kdim), (0, mp - m)))
    w_t = jnp.transpose(conv_w, (0, 2, 3, 1)).reshape(cout, kdim)             # (Cout, K)
    w_t = jnp.pad(w_t, ((0, co_p - cout), (0, kp - kdim))).astype(COMPUTE_DTYPE)

    # Explicit VMEM limit sized from the double-buffered working set (above the
    # 32 MiB scoped default where useful, below v7x's 64 MiB physical).
    p1_vmem = 2 * co_p * kp * 2 + 2 * kp * tm * 2 + 2 * co_p * tm * 2 + 4 * co_p * 128 * 4
    p2_vmem = 2 * co_p * tm * 2 + 2 * co_p * tm * 4 + 4 * co_p * 4
    vmem_limit = int(min(max(2 * max(p1_vmem, p2_vmem), 32 * 1024 * 1024),
                         48 * 1024 * 1024))

    part_cols = num_tiles * 128
    patch_bytes = kp * mp * 2
    w_bytes = co_p * kp * 2
    y_bytes = co_p * mp * 2

    # ---- Phase 1: conv matmul + per-tile BN partials (both M-tiled -> "parallel") ----
    y_flat, partials = pl.pallas_call(
        conv_stats_kernel,
        out_shape=(jax.ShapeDtypeStruct((co_p, mp), COMPUTE_DTYPE),
                   jax.ShapeDtypeStruct((2 * co_p, part_cols), jnp.float32)),
        grid=(num_tiles,),
        in_specs=[
            pl.BlockSpec((co_p, kp), lambda i: (0, 0)),
            pl.BlockSpec((kp, tm), lambda i: (0, i)),
        ],
        out_specs=(
            pl.BlockSpec((co_p, tm), lambda i: (0, i)),
            pl.BlockSpec((2 * co_p, 128), lambda i: (0, i)),
        ),
        compiler_params=pltpu.CompilerParams(
            dimension_semantics=("parallel",),
            vmem_limit_bytes=vmem_limit),
        cost_estimate=pl.CostEstimate(
            flops=2 * mp * kp * co_p + 4 * mp * co_p,
            transcendentals=0,
            bytes_accessed=patch_bytes + w_bytes + y_bytes + 2 * co_p * part_cols * 4),
    )(w_t, patches_t)

    # ---- Fold BN once in XLA (tiny): reduce partials, build scale/shift (co_p, 1) ----
    stats = partials.reshape(2 * co_p, num_tiles, 128)[:, :, 0].sum(axis=1)   # (2*co_p,)
    ssum, ssq = stats[:co_p], stats[co_p:]
    inv_m = 1.0 / m                      # padded M columns are exact zeros -> excluded
    mean = ssum * inv_m
    # Biased variance (PyTorch train-mode normalization).  NOTE: E[y^2]-E[y]^2 in f32
    # can cancel when |mean| >> std; fine at these scales (TODO(synk): Welford/shifted
    # accumulation for production).  Padded Cout rows have sum=sumsq=0 -> var=0,
    # inv_std=1/sqrt(eps); harmless because gamma/beta padding is 0 and rows are sliced off.
    var = jnp.maximum(ssq * inv_m - mean * mean, 0.0)
    inv_std = lax.rsqrt(var + BN_EPS)
    gamma_p = jnp.pad(bn_gamma.astype(jnp.float32), (0, co_p - cout))
    beta_p = jnp.pad(bn_beta.astype(jnp.float32), (0, co_p - cout))
    scale_v = gamma_p * inv_std
    shift_v = beta_p - mean * scale_v
    scale = scale_v.reshape(co_p, 1)
    shift = shift_v.reshape(co_p, 1)

    # ---- Phase 2: pure elementwise BN affine + ReLU6 over y, lane-dense stores ----
    out_t = pl.pallas_call(
        bn_relu6_kernel,
        out_shape=jax.ShapeDtypeStruct((co_p, mp), jnp.float32),
        grid=(num_tiles,),
        in_specs=[
            pl.BlockSpec((co_p, 1), lambda i: (0, 0)),
            pl.BlockSpec((co_p, 1), lambda i: (0, 0)),
            pl.BlockSpec((co_p, tm), lambda i: (0, i)),
        ],
        out_specs=pl.BlockSpec((co_p, tm), lambda i: (0, i)),
        compiler_params=pltpu.CompilerParams(
            dimension_semantics=("parallel",),
            vmem_limit_bytes=vmem_limit),
        cost_estimate=pl.CostEstimate(
            flops=3 * co_p * mp,
            transcendentals=0,
            bytes_accessed=y_bytes + co_p * mp * 4 + 2 * co_p * 4),
    )(scale, shift, y_flat)

    # (Cout, M) -> (N, Cout, Ho, Wo) with a cheap leading-axis transpose (kept to
    # preserve the module's NCHW f32 output contract).
    out = out_t[:cout, :m].reshape(cout, n, ho, wo)
    return jnp.transpose(out, (1, 0, 2, 3))


def reference_forward(x_nchw, conv_w, bn_gamma, bn_beta, stride=2, pad=1):
    """Pure-JAX reference (f32) for verification."""
    y = lax.conv_general_dilated(
        x_nchw.astype(jnp.float32),
        conv_w.astype(jnp.float32),
        window_strides=(stride, stride),
        padding=[(pad, pad), (pad, pad)],
        dimension_numbers=("NCHW", "OIHW", "NCHW"),
    )
    mean = jnp.mean(y, axis=(0, 2, 3), keepdims=True)
    var = jnp.mean((y - mean) ** 2, axis=(0, 2, 3), keepdims=True)
    y = (y - mean) / jnp.sqrt(var + BN_EPS)
    y = y * bn_gamma.reshape(1, -1, 1, 1) + bn_beta.reshape(1, -1, 1, 1)
    return jnp.clip(y, 0.0, 6.0)


if __name__ == "__main__":
    # Shapes consistent with the module: Conv2d(in_chan=4, out_chan=8, k=3, s=2, p=1).
    N, CIN, H, W = 2, 4, 16, 16
    COUT, K = 8, 3

    key = jax.random.PRNGKey(0)
    kx, kw = jax.random.split(key)
    x = jax.random.normal(kx, (N, CIN, H, W), dtype=jnp.float32)
    conv_w = 0.1 * jax.random.normal(kw, (COUT, CIN, K, K), dtype=jnp.float32)
    bn_gamma = jnp.ones((COUT,), dtype=jnp.float32)   # BatchNorm2d affine weight init
    bn_beta = jnp.zeros((COUT,), dtype=jnp.float32)   # BatchNorm2d affine bias init

    out = simple_convolution_forward(x, conv_w, bn_gamma, bn_beta,
                                     kernel=K, stride=2, pad=1)
    out = jax.block_until_ready(out)
    assert out.shape == (N, COUT, H // 2, W // 2), out.shape

    # Tight check vs. a reference fed the same bf16-quantized operands (isolates the
    # kernel math from the deliberate bf16 input cast; tolerance covers the bf16
    # storage of the intermediate conv output between the two calls).
    xq = x.astype(jnp.bfloat16).astype(jnp.float32)
    wq = conv_w.astype(jnp.bfloat16).astype(jnp.float32)
    ref_q = jax.block_until_ready(reference_forward(xq, wq, bn_gamma, bn_beta))
    assert jnp.allclose(out, ref_q, atol=2e-2, rtol=2e-2), \
        float(jnp.max(jnp.abs(out - ref_q)))

    # Looser check vs. the full-f32 reference (bounds total bf16 error).
    ref = jax.block_until_ready(reference_forward(x, conv_w, bn_gamma, bn_beta))
    assert jnp.allclose(out, ref, atol=5e-2, rtol=5e-2), \
        float(jnp.max(jnp.abs(out - ref)))

    print("KERNEL_OK")
</pallas_src>

<mosaic_0001>
module attributes {stable_mosaic.version = 11 : i64} {
  func.func @conv_stats_kernel(%arg0: i32, %arg1: memref<8x48xbf16, #tpu.memory_space<vmem>>, %arg2: memref<48x128xbf16, #tpu.memory_space<vmem>>, %arg3: memref<8x128xbf16, #tpu.memory_space<vmem>>, %arg4: memref<16x128xf32, #tpu.memory_space<vmem>>) attributes {dimension_semantics = [#tpu.dimension_semantics<parallel>], iteration_bounds = array<i64: 1>, scalar_prefetch = 0 : i64, scratch_operands = 0 : i64, tpu.core_type = #tpu.core_type<tc>, window_params = [{pipeline_mode = #tpu.pipeline_mode<synchronous>, transform_indices = @transform_0, window_bounds = array<i64: 8, 48>}, {transform_indices = @transform_1, window_bounds = array<i64: 48, 128>}, {transform_indices = @transform_2, window_bounds = array<i64: 8, 128>}, {transform_indices = @transform_3, window_bounds = array<i64: 16, 128>}]} {
    %c0 = arith.constant 0 : index
    %c0_0 = arith.constant 0 : index
    %0 = vector.load %arg1[%c0, %c0_0] : memref<8x48xbf16, #tpu.memory_space<vmem>>, vector<8x48xbf16>
    %c0_1 = arith.constant 0 : index
    %c0_2 = arith.constant 0 : index
    %1 = vector.load %arg2[%c0_1, %c0_2] : memref<48x128xbf16, #tpu.memory_space<vmem>>, vector<48x128xbf16>
    %cst = arith.constant dense<0.000000e+00> : vector<8x128xf32>
    %2 = tpu.matmul %0, %1, %cst {dimension_numbers = #tpu.dot_dimension_numbers<[1], [0], [0], [1], [0, 0, 1, 1], [], []>} : vector<8x48xbf16>, vector<48x128xbf16>, vector<8x128xf32> -> vector<8x128xf32>
    %3 = arith.truncf %2 : vector<8x128xf32> to vector<8x128xbf16>
    %c0_3 = arith.constant 0 : index
    %c0_4 = arith.constant 0 : index
    %4 = vector.load %arg3[%c0_3, %c0_4] : memref<8x128xbf16, #tpu.memory_space<vmem>>, vector<8x128xbf16>
    tpu.vector_store %arg3[%c0_3, %c0_4], %3 {strides = array<i32>} : memref<8x128xbf16, #tpu.memory_space<vmem>>, vector<8x128xbf16>,
    %cst_5 = arith.constant dense<0.000000e+00> : vector<8xf32>
    %5 = vector.multi_reduction <add>, %2, %cst_5 [1] : vector<8x128xf32> to vector<8xf32>
    %6 = vector.shape_cast %5 : vector<8xf32> to vector<8x1xf32>
    %7 = arith.mulf %2, %2 : vector<8x128xf32>
    %cst_6 = arith.constant dense<0.000000e+00> : vector<8xf32>
    %8 = vector.multi_reduction <add>, %7, %cst_6 [1] : vector<8x128xf32> to vector<8xf32>
    %9 = vector.shape_cast %8 : vector<8xf32> to vector<8x1xf32>
    %10 = vector.shape_cast %6 : vector<8x1xf32> to vector<8x1xf32>
    %11 = vector.broadcast %10 : vector<8x1xf32> to vector<8x128xf32>
    %c0_7 = arith.constant 0 : index
    %c0_8 = arith.constant 0 : index
    %12 = vector.load %arg4[%c0_7, %c0_8] : memref<16x128xf32, #tpu.memory_space<vmem>>, vector<8x128xf32>
    tpu.vector_store %arg4[%c0_7, %c0_8], %11 {strides = array<i32>} : memref<16x128xf32, #tpu.memory_space<vmem>>, vector<8x128xf32>,
    %13 = vector.shape_cast %9 : vector<8x1xf32> to vector<8x1xf32>
    %14 = vector.broadcast %13 : vector<8x1xf32> to vector<8x128xf32>
    %c8 = arith.constant 8 : index
    %c0_9 = arith.constant 0 : index
    %15 = vector.load %arg4[%c8, %c0_9] : memref<16x128xf32, #tpu.memory_space<vmem>>, vector<8x128xf32>
    tpu.vector_store %arg4[%c8, %c0_9], %14 {strides = array<i32>} : memref<16x128xf32, #tpu.memory_space<vmem>>, vector<8x128xf32>,
    return
  }
  func.func @transform_0(%arg0: i32) -> (i32, i32) {
    %c0_i32 = arith.constant 0 : i32
    %c0_i32_0 = arith.constant 0 : i32
    %c0_i32_1 = arith.constant 0 : i32
    return %c0_i32, %c0_i32_0 : i32, i32
  }
  func.func @transform_1(%arg0: i32) -> (i32, i32) {
    %c0_i32 = arith.constant 0 : i32
    %c0_i32_0 = arith.constant 0 : i32
    return %c0_i32, %arg0 : i32, i32
  }
  func.func @transform_2(%arg0: i32) -> (i32, i32) {
    %c0_i32 = arith.constant 0 : i32
    %c0_i32_0 = arith.constant 0 : i32
    return %c0_i32, %arg0 : i32, i32
  }
  func.func @transform_3(%arg0: i32) -> (i32, i32) {
    %c0_i32 = arith.constant 0 : i32
    %c0_i32_0 = arith.constant 0 : i32
    return %c0_i32, %arg0 : i32, i32
  }
}

module attributes {stable_mosaic.version = 11 : i64} {
  func.func @bn_relu6_kernel(%arg0: i32, %arg1: memref<8x1xf32, #tpu.memory_space<vmem>>, %arg2: memref<8x1xf32, #tpu.memory_space<vmem>>, %arg3: memref<8x128xbf16, #tpu.memory_space<vmem>>, %arg4: memref<8x128xf32, #tpu.memory_space<vmem>>) attributes {dimension_semantics = [#tpu.dimension_semantics<parallel>], iteration_bounds = array<i64: 1>, scalar_prefetch = 0 : i64, scratch_operands = 0 : i64, tpu.core_type = #tpu.core_type<tc>, window_params = [{pipeline_mode = #tpu.pipeline_mode<synchronous>, transform_indices = @transform_0, window_bounds = array<i64: 8, 1>}, {pipeline_mode = #tpu.pipeline_mode<synchronous>, transform_indices = @transform_1, window_bounds = array<i64: 8, 1>}, {transform_indices = @transform_2, window_bounds = array<i64: 8, 128>}, {transform_indices = @transform_3, window_bounds = array<i64: 8, 128>}]} {
    %c0 = arith.constant 0 : index
    %c0_0 = arith.constant 0 : index
    %0 = vector.load %arg3[%c0, %c0_0] : memref<8x128xbf16, #tpu.memory_space<vmem>>, vector<8x128xbf16>
    %1 = arith.extf %0 : vector<8x128xbf16> to vector<8x128xf32>
    %c0_1 = arith.constant 0 : index
    %c0_2 = arith.constant 0 : index
    %2 = vector.load %arg1[%c0_1, %c0_2] : memref<8x1xf32, #tpu.memory_space<vmem>>, vector<8x1xf32>
    %3 = vector.broadcast %2 : vector<8x1xf32> to vector<8x128xf32>
    %4 = arith.mulf %1, %3 : vector<8x128xf32>
    %c0_3 = arith.constant 0 : index
    %c0_4 = arith.constant 0 : index
    %5 = vector.load %arg2[%c0_3, %c0_4] : memref<8x1xf32, #tpu.memory_space<vmem>>, vector<8x1xf32>
    %6 = vector.broadcast %5 : vector<8x1xf32> to vector<8x128xf32>
    %7 = arith.addf %4, %6 : vector<8x128xf32>
    %cst = arith.constant 0.000000e+00 : f32
    %cst_5 = arith.constant 6.000000e+00 : f32
    %8 = vector.broadcast %cst : f32 to vector<8x128xf32>
    %9 = arith.maximumf %8, %7 : vector<8x128xf32>
    %10 = vector.broadcast %cst_5 : f32 to vector<8x128xf32>
    %11 = arith.minimumf %10, %9 : vector<8x128xf32>
    %c0_6 = arith.constant 0 : index
    %c0_7 = arith.constant 0 : index
    %12 = vector.load %arg4[%c0_6, %c0_7] : memref<8x128xf32, #tpu.memory_space<vmem>>, vector<8x128xf32>
    tpu.vector_store %arg4[%c0_6, %c0_7], %11 {strides = array<i32>} : memref<8x128xf32, #tpu.memory_space<vmem>>, vector<8x128xf32>,
    return
  }
  func.func @transform_0(%arg0: i32) -> (i32, i32) {
    %c0_i32 = arith.constant 0 : i32
    %c0_i32_0 = arith.constant 0 : i32
    %c0_i32_1 = arith.constant 0 : i32
    return %c0_i32, %c0_i32_0 : i32, i32
  }
  func.func @transform_1(%arg0: i32) -> (i32, i32) {
    %c0_i32 = arith.constant 0 : i32
    %c0_i32_0 = arith.constant 0 : i32
    %c0_i32_1 = arith.constant 0 : i32
    return %c0_i32, %c0_i32_0 : i32, i32
  }
  func.func @transform_2(%arg0: i32) -> (i32, i32) {
    %c0_i32 = arith.constant 0 : i32
    %c0_i32_0 = arith.constant 0 : i32
    return %c0_i32, %arg0 : i32, i32
  }
  func.func @transform_3(%arg0: i32) -> (i32, i32) {
    %c0_i32 = arith.constant 0 : i32
    %c0_i32_0 = arith.constant 0 : i32
    return %c0_i32, %arg0 : i32, i32
  }
}

</mosaic_0001>

<llo_original>
// kernel: simple_convolution_forward.2
$region0: #{simple_convolution_forward.2}
  #allocation0 [shape = 'u32[]', space=smem, size = 0x4, offset = 0x4, fixed_abs, tag = 'smem constant byte address 0x4 - core index']
  #allocation1 [shape = 'u32[72,128]{1,0:T(1,128)}', space=vmem, size = 0x9000, scoped, tag = 'internal scratch']
  %s0 = inlined_call_operand.vmem [shape: bf16[8,48], index: 0, kind: input, shape index: {}]
  %s1 = inlined_call_operand.vmem [shape: bf16[48,128], index: 1, kind: input, shape index: {}]
  %s2 = inlined_call_operand.vmem [shape: bf16[8,128], index: 2, kind: output, shape index: {0}]
  %s3 = inlined_call_operand.vmem [shape: f32[16,128], index: 3, kind: output, shape index: {1}]
  %4 = xla_tuple %s2, %s3
  %s5 = sld [smem:[#allocation0]]
  $region26: #{simple_convolution_forward.2} parent=0
    _
  %s7 = ssub.s32 1, %s5
  %s8 = scalar_select 0, %s7, %s5
  // Predicated region
  $region2: #{simple_convolution_forward.2} parent=0 // pred_check
    _
  $region3: #{simple_convolution_forward.2} parent=0 // pred_check_branch
    %10 = sbr.rel (0) target = $region5
  $region4: #{simple_convolution_forward.2} parent=0 // pred_region
    _
  $region5: #{simple_convolution_forward.2} parent=0 // pred_fallthru
    _
  // Predicated region
  $region6: #{simple_convolution_forward.2} parent=0 // pred_check
    _
  $region7: #{simple_convolution_forward.2} parent=0 // pred_check_branch
    %12 = sbr.rel (0) target = $region9
  $region8: #{simple_convolution_forward.2} parent=0 // pred_region
    _
  $region9: #{simple_convolution_forward.2} parent=0 // pred_fallthru
    _
  %v14 = vld [vmem:[%s0] sm:$0xf]
  %v15 = vld [vmem:[%s1] sm:$0xf]
  %v16 = vld [vmem:[%s1 + $0x4] sm:$0xf]
  %v17 = vld [vmem:[%s1 + $0x8] sm:$0xf]
  %v18 = vld [vmem:[%s1 + $0xc] sm:$0xf]
  %v19 = vld [vmem:[%s1 + $0x10] sm:$0xf]
  %v20 = vld [vmem:[%s1 + $0x14] sm:$0xf]
  %v27 = vunpack.c.l.b16 %v15
  %v28 = vunpack.c.l.b16 %v16
  %v29 = vunpack.c.l.b16 %v17
  %v30 = vunpack.c.l.b16 %v18
  %v31 = vunpack.c.l.b16 %v19
  %v32 = vunpack.c.l.b16 %v20
  %v33 = vpack.c.b16 %v28, %v27
  %v34 = vpack.c.b16 %v30, %v29
  %v35 = vpack.c.b16 %v32, %v31
  %vm39 = vcmask 392192
  %v41 = vsel %vm39, %v14, 0
  %43 = vmatpush.bf16.msra.mxu0 0
  %44 = vmatpush.bf16.msra.mxu0 0
  %45 = vmatpush.bf16.msra.mxu0 0
  %46 = vmatpush.bf16.msra.mxu0 0
  %47 = vmatpush.bf16.msra.mxu0 0
  %48 = vmatpush.bf16.msra.mxu0 %v35
  %49 = vmatpush.bf16.msra.mxu0 %v34
  %50 = vmatpush.bf16.msra.mxu0 %v33
  %51 = vmatmul.bf16.gmra.mxu0 %v41
  %v52 = vpop.f32.mrf.mxu0
  %v53 = vadd.f32 0.0, %v52
  %v54 = vpop.f32.mrf.mxu0
  %55 = vdwg.mxu0
  %v56 = vpack.c.bf16 %v53, %v53
  %57 = vst [vmem:[%s2] sm:$0xf] %v56
  %58 = vadd.xlane.f32.xlu0 %v53
  %v59 = vpop.xlane.xlu0 %58
  %v60 = vmul.f32 %v53, %v53
  %61 = vadd.xlane.f32.xlu0 %v60
  %v62 = vpop.xlane.xlu0 %61
  %63 = vst [vmem:[%s3] sm:$0xff] %v59
  %64 = vst [vmem:[%s3 + $0x8] sm:$0xff] %v62
  // Predicated region
  $region10: #{simple_convolution_forward.2} parent=0 // pred_check
    _
  $region11: #{simple_convolution_forward.2} parent=0 // pred_check_branch
    %66 = sbr.rel (0) target = $region13
  $region12: #{simple_convolution_forward.2} parent=0 // pred_region
    _
  $region13: #{simple_convolution_forward.2} parent=0 // pred_fallthru
    _
  // Predicated region
  $region14: #{simple_convolution_forward.2} parent=0 // pred_check
    _
  $region15: #{simple_convolution_forward.2} parent=0 // pred_check_branch
    %68 = sbr.rel (0) target = $region17
  $region16: #{simple_convolution_forward.2} parent=0 // pred_region
    _
  $region17: #{simple_convolution_forward.2} parent=0 // pred_fallthru
    _
  // Predicated region
  $region18: #{simple_convolution_forward.2} parent=0 // pred_check
    _
  $region19: #{simple_convolution_forward.2} parent=0 // pred_check_branch
    %70 = sbr.rel (0) target = $region21
  $region20: #{simple_convolution_forward.2} parent=0 // pred_region
    _
  $region21: #{simple_convolution_forward.2} parent=0 // pred_fallthru
    _
  // Predicated region
  $region22: #{simple_convolution_forward.2} parent=0 // pred_check
    _
  $region23: #{simple_convolution_forward.2} parent=0 // pred_check_branch
    %72 = sbr.rel (0) target = $region25
  $region24: #{simple_convolution_forward.2} parent=0 // pred_region
    _
  $region25: #{simple_convolution_forward.2} parent=0 // pred_fallthru
    _

// kernel: simple_convolution_forward.3
$region0: #{simple_convolution_forward.3}
  #allocation0 [shape = 'u32[]', space=smem, size = 0x4, offset = 0x4, fixed_abs, tag = 'smem constant byte address 0x4 - core index']
  #allocation1 [shape = 'u32[72,128]{1,0:T(1,128)}', space=vmem, size = 0x9000, scoped, tag = 'internal scratch']
  %s0 = inlined_call_operand.vmem [shape: f32[8,1], index: 0, kind: input, shape index: {}]
  %s1 = inlined_call_operand.vmem [shape: f32[8,1], index: 1, kind: input, shape index: {}]
  %s2 = inlined_call_operand.vmem [shape: bf16[8,128], index: 2, kind: input, shape index: {}]
  %s3 = inlined_call_operand.vmem [shape: f32[8,128], index: 3, kind: output, shape index: {}]
  %s4 = sld [smem:[#allocation0]]
  $region22: #{simple_convolution_forward.3} parent=0
    _
  %s6 = ssub.s32 1, %s4
  %s7 = scalar_select 0, %s6, %s4
  // Predicated region
  $region2: #{simple_convolution_forward.3} parent=0 // pred_check
    _
  $region3: #{simple_convolution_forward.3} parent=0 // pred_check_branch
    %9 = sbr.rel (0) target = $region5
  $region4: #{simple_convolution_forward.3} parent=0 // pred_region
    _
  $region5: #{simple_convolution_forward.3} parent=0 // pred_fallthru
    _
  // Predicated region
  $region6: #{simple_convolution_forward.3} parent=0 // pred_check
    _
  $region7: #{simple_convolution_forward.3} parent=0 // pred_check_branch
    %11 = sbr.rel (0) target = $region9
  $region8: #{simple_convolution_forward.3} parent=0 // pred_region
    _
  $region9: #{simple_convolution_forward.3} parent=0 // pred_fallthru
    _
  // Predicated region
  $region10: #{simple_convolution_forward.3} parent=0 // pred_check
    _
  $region11: #{simple_convolution_forward.3} parent=0 // pred_check_branch
    %13 = sbr.rel (0) target = $region13
  $region12: #{simple_convolution_forward.3} parent=0 // pred_region
    _
  $region13: #{simple_convolution_forward.3} parent=0 // pred_fallthru
    _
  %v14 = vld [vmem:[%s2] sm:$0xf]
  %v15 = vunpack.c.l.bf16 %v14
  %v16 = vld [vmem:[%s0] sm:$0xff]
  %18 = vset.pattern.permute.xlu0 0
  %19 = vperm.xlu0 %18, %v16
  %v20 = vpop.permute.xlu0 %19
  %v22 = vmul.f32 %v15, %v20
  %v23 = vld [vmem:[%s1] sm:$0xff]
  %25 = vset.pattern.permute.xlu0 0
  %26 = vperm.xlu0 %25, %v23
  %v27 = vpop.permute.xlu0 %26
  %v29 = vadd.f32 %v22, %v27
  %v30 = vmax.f32 %v29, 0.0
  %v31 = vmin.f32 %v30, 6.0
  %32 = vst [vmem:[%s3] sm:$0xff] %v31
  // Predicated region
  $region14: #{simple_convolution_forward.3} parent=0 // pred_check
    _
  $region15: #{simple_convolution_forward.3} parent=0 // pred_check_branch
    %34 = sbr.rel (0) target = $region17
  $region16: #{simple_convolution_forward.3} parent=0 // pred_region
    _
  $region17: #{simple_convolution_forward.3} parent=0 // pred_fallthru
    _
  // Predicated region
  $region18: #{simple_convolution_forward.3} parent=0 // pred_check
    _
  $region19: #{simple_convolution_forward.3} parent=0 // pred_check_branch
    %36 = sbr.rel (0) target = $region21
  $region20: #{simple_convolution_forward.3} parent=0 // pred_region
    _
  $region21: #{simple_convolution_forward.3} parent=0 // pred_fallthru
    _

</llo_original>
